<compile_context>
chip_gen: v7x
topology: tpu7x:2x2x1
jax: 0.10.0
libtpu: 0.0.40
codegen_flags: <defaults>
</compile_context>

<pallas_src>
import functools

import jax
import jax.numpy as jnp
from jax.experimental import pallas as pl
from jax.experimental.pallas import tpu as pltpu

ACTIVATION = "relu"   # first FeatureNN layer: "relu" -> LinReLU, "exu" -> ExU


def _fipnam_kernel(x_ref, b0_ref, e_ref, b1_ref, w1_ref, w2_ref, b2_ref,
                   wl_ref, sig_ref, conc_ref, *, activation):
    # TODO(synk): nn.Dropout is identity in eval mode; training-mode RNG
    # dropout is not implemented.
    md = e_ref.dtype                                      # matmul operand dtype

    x = x_ref[...]                                        # (TB, F) f32
    xc = x - b0_ref[...]                                  # broadcast (1, F)

    # Layer 0: F x LinReLU/ExU(1, U) folded into one expansion matmul
    # (E[f, f*U:(f+1)*U] = w0[f] / exp(w0[f]), zeros elsewhere).
    h0 = jnp.dot(xc.astype(md), e_ref[...],
                 preferred_element_type=jnp.float32)      # (TB, F*U)
    if activation == "exu":
        h0 = jnp.clip(jax.nn.relu(h0), 0.0, 1.0)
    else:
        h0 = jax.nn.relu(h0)

    # Layer 1: F x LinReLU(U, H) as one block-diagonal (F*U, F*H) MXU matmul.
    h1 = jax.nn.relu(
        jnp.dot((h0 - b1_ref[...]).astype(md), w1_ref[...],
                preferred_element_type=jnp.float32))      # (TB, F*H)

    # Layer 2: F x nn.Linear(H, 1) as one block-diagonal (F*H, F) matmul;
    # conc is produced directly in (TB, F) layout -- no transpose.
    conc = jnp.dot(h1.astype(md), w2_ref[...],
                   preferred_element_type=jnp.float32) + b2_ref[...]   # (TB, F)
    conc_ref[...] = conc

    # Mixing nn.Linear(F, O, bias=False) + sigmoid (tiny; kept in f32).
    logits = jnp.dot(conc, wl_ref[...], preferred_element_type=jnp.float32)
    sig_ref[...] = jax.nn.sigmoid(logits)


def _round_up(x, m):
    return ((x + m - 1) // m) * m


def _pick_batch_tile(batch, target=512):
    """Large, lane-dense batch tile (multiple of 8).  Keeps >= 2 grid steps
    whenever the batch allows it, so both v7x TensorCores get work."""
    if batch <= 16:
        return _round_up(batch, 8)
    half = _round_up(pl.cdiv(batch, 2), 8)
    return min(target, half)


def _vmem_limit_bytes(tb, F, U, H, O):
    """Accurate (tile-padded, double-buffered) VMEM need plus slack.  Stays a
    few MiB for realistic shapes -- well inside v7x's 64 MiB physical VMEM."""
    def padded(r, c):                                     # f32 bytes, (8,128)-padded
        return _round_up(r, 8) * _round_up(c, 128) * 4
    FU, FH = F * U, F * H
    weights = (padded(F, FU) + padded(1, FU) + padded(FU, FH) + padded(FH, F)
               + 2 * padded(1, F) + padded(F, O))
    io = padded(tb, F) * 2 + padded(tb, O)
    interm = padded(tb, FU) + padded(tb, FH) + padded(tb, F) + padded(tb, O)
    est = 2 * (weights + io) + 2 * interm + (4 << 20)
    return int(min(max(est, 8 << 20), 40 << 20))


def _block_diag_weights(params, activation, matmul_dtype):
    """Fold the F tiny per-feature MLPs into dense block-diagonal matrices.

    TODO(synk): if F grows to hundreds, tile features as a second "arbitrary"
    grid axis with per-group block-diagonal weights (W1_bd is F^2*U*H*4 bytes).
    """
    F, U = params["w0"].shape
    eye = jnp.eye(F, dtype=jnp.float32)

    w0 = params["w0"]
    if activation == "exu":
        w0 = jnp.exp(w0)
    # E[g, f*U + u]           = w0[f, u]      iff g == f
    e = jnp.einsum("gf,fu->gfu", eye, w0).reshape(F, F * U)
    # W1_bd[f*U + u, g*H + h] = w1[f, u, h]   iff f == g
    w1_bd = jnp.einsum("fg,fuh->fugh", eye, params["w1"]).reshape(
        F * U, F * params["w1"].shape[2])
    # W2_bd[f*H + h, g]       = w2[f, h]      iff f == g
    w2_bd = jnp.einsum("fg,fh->fhg", eye, params["w2"]).reshape(
        F * params["w2"].shape[1], F)

    md = matmul_dtype
    return (e.astype(md), w1_bd.astype(md), w2_bd.astype(md),
            params["b0"].reshape(1, F),
            params["b1"].reshape(1, F * U),
            params["b2"].reshape(1, F),
            params["wl_t"].astype(jnp.float32))


def fipnam_forward(x, params, *, activation=ACTIVATION, batch_tile=None,
                   matmul_dtype=jnp.float32):
    """matmul_dtype=jnp.bfloat16 is recommended on v6e/v7x (bf16-native MXU,
    f32 accumulation); keep the default f32 on v5e-and-older if in doubt."""
    B, F = x.shape
    U = params["w0"].shape[1]
    H = params["w1"].shape[2]
    O = params["wl_t"].shape[1]

    tb = batch_tile if batch_tile is not None else _pick_batch_tile(B)
    tb = min(_round_up(tb, 8), _round_up(B, 8))
    # Any batch size works: pad to a tile multiple, slice the tail off below.
    Bp = pl.cdiv(B, tb) * tb
    xp = jnp.pad(x, ((0, Bp - B), (0, 0))) if Bp != B else x

    e, w1_bd, w2_bd, b0, b1, b2, wl = _block_diag_weights(
        params, activation, matmul_dtype)

    def full_spec(a):
        n = a.ndim
        return pl.BlockSpec(a.shape, lambda i, _n=n: (0,) * _n)

    grid = (Bp // tb,)
    kernel = functools.partial(_fipnam_kernel, activation=activation)

    sig, conc = pl.pallas_call(
        kernel,
        out_shape=(jax.ShapeDtypeStruct((Bp, O), jnp.float32),
                   jax.ShapeDtypeStruct((Bp, F), jnp.float32)),
        grid=grid,
        in_specs=[
            pl.BlockSpec((tb, F), lambda i: (i, 0)),   # x tile (streamed, lane-dense)
            full_spec(b0),                             # resident weights / biases
            full_spec(e),
            full_spec(b1),
            full_spec(w1_bd),
            full_spec(w2_bd),
            full_spec(b2),
            full_spec(wl),
        ],
        out_specs=(pl.BlockSpec((tb, O), lambda i: (i, 0)),
                   pl.BlockSpec((tb, F), lambda i: (i, 0))),
        compiler_params=pltpu.CompilerParams(
            dimension_semantics=("parallel",),
            vmem_limit_bytes=_vmem_limit_bytes(tb, F, U, H, O)),
    )(xp, b0, e, b1, w1_bd, w2_bd, b2, wl)

    if Bp != B:
        sig, conc = sig[:B], conc[:B]
    return sig, conc


def fipnam_reference(x, params, *, activation=ACTIVATION):
    """Pure-JAX reference mirroring the PyTorch per-feature loop."""
    F = x.shape[1]
    outs = []
    for f in range(F):
        x_f = x[:, f:f + 1]                                  # (B, 1)
        w0_f = params["w0"][f][None, :]                      # (1, U)
        if activation == "exu":
            h0 = jnp.clip(jax.nn.relu((x_f - params["b0"][f]) * jnp.exp(w0_f)), 0.0, 1.0)
        else:
            h0 = jax.nn.relu((x_f - params["b0"][f]) * w0_f)
        h1 = jax.nn.relu((h0 - params["b1"][f][None, :]) @ params["w1"][f])
        out_f = h1 @ params["w2"][f][:, None] + params["b2"][f]
        outs.append(out_f)
    conc = jnp.concatenate(outs, axis=-1)                    # (B, F)
    return jax.nn.sigmoid(conc @ params["wl_t"]), conc


def init_params(key, *, num_inputs, num_units, hidden, num_output,
                activation=ACTIVATION):
    """Deterministic synthetic init mirroring the PyTorch module's shapes."""
    F, U, H, O = num_inputs, num_units, hidden, num_output
    k = jax.random.split(key, 7)

    def trunc(kk, shape, std, mean=0.0):
        return mean + std * jax.random.truncated_normal(kk, -2.0, 2.0, shape, jnp.float32)

    def xav(kk, shape, fan_in, fan_out):
        lim = jnp.sqrt(6.0 / (fan_in + fan_out))
        return jax.random.uniform(kk, shape, jnp.float32, -lim, lim)

    return {
        # first layer (LinReLU/ExU, in_features=1): weight (1,U) per feature -> (F,U)
        "w0": (trunc(k[0], (F, U), 0.5, 4.0) if activation == "exu"
               else xav(k[0], (F, U), 1, U)),
        "b0": trunc(k[1], (F,), 0.5),
        # hidden LinReLU(U, H) per feature
        "w1": xav(k[2], (F, U, H), U, H),
        "b1": trunc(k[3], (F, U), 0.5),
        # final nn.Linear(H, 1) per feature: weight (1,H) -> (F,H), bias -> (F,)
        "w2": xav(k[4], (F, H), H, 1),
        "b2": trunc(k[5], (F,), 0.5),
        # mixing nn.Linear(F, O, bias=False), stored pre-transposed (F, O)
        "wl_t": xav(k[6], (F, O), F, O),
    }


if __name__ == "__main__":
    # batch, num_inputs, num_units, hidden_sizes=[32], num_output
    B, F, U, H, O = 64, 8, 32, 32, 2

    key = jax.random.PRNGKey(0)
    kx, kp = jax.random.split(key)
    x = jax.random.normal(kx, (B, F), jnp.float32)
    params = init_params(kp, num_inputs=F, num_units=U, hidden=H, num_output=O)

    # 1) default (relu, f32 matmuls); default tile -> 2 grid steps at B=64.
    sig, conc = fipnam_forward(x, params)
    jax.block_until_ready((sig, conc))
    sig_ref, conc_ref = fipnam_reference(x, params)
    assert sig.shape == (B, O) and conc.shape == (B, F)
    assert jnp.allclose(sig, sig_ref, atol=2e-3, rtol=2e-3)
    assert jnp.allclose(conc, conc_ref, atol=2e-3, rtol=2e-3)

    # 2) ExU first layer, f32 matmuls.
    sig_e, conc_e = fipnam_forward(x, params, activation="exu")
    sig_er, conc_er = fipnam_reference(x, params, activation="exu")
    jax.block_until_ready((sig_e, conc_e))
    assert jnp.allclose(sig_e, sig_er, atol=2e-3, rtol=2e-3)
    assert jnp.allclose(conc_e, conc_er, atol=2e-3, rtol=2e-3)

    # 3) bf16 matmul operands (v6e/v7x fast path; f32 accumulation + epilogue).
    sig_b, conc_b = fipnam_forward(x, params, matmul_dtype=jnp.bfloat16)
    jax.block_until_ready((sig_b, conc_b))
    assert jnp.allclose(sig_b, sig_ref, atol=5e-2, rtol=5e-2)
    assert jnp.allclose(conc_b, conc_ref, atol=5e-2, rtol=5e-2)

    # 4) awkward batch (tail padded inside the wrapper, sliced off afterwards).
    Bo = 37
    xo = x[:Bo]
    sig_o, conc_o = fipnam_forward(xo, params)
    jax.block_until_ready((sig_o, conc_o))
    assert sig_o.shape == (Bo, O) and conc_o.shape == (Bo, F)
    assert jnp.allclose(sig_o, sig_ref[:Bo], atol=2e-3, rtol=2e-3)
    assert jnp.allclose(conc_o, conc_ref[:Bo], atol=2e-3, rtol=2e-3)

    print("KERNEL_OK")
</pallas_src>

<mosaic_0001>
module attributes {stable_mosaic.version = 11 : i64} {
  func.func @_fipnam_kernel(%arg0: i32, %arg1: memref<32x8xf32, #tpu.memory_space<vmem>>, %arg2: memref<1x8xf32, #tpu.memory_space<vmem>>, %arg3: memref<8x256xf32, #tpu.memory_space<vmem>>, %arg4: memref<1x256xf32, #tpu.memory_space<vmem>>, %arg5: memref<256x256xf32, #tpu.memory_space<vmem>>, %arg6: memref<256x8xf32, #tpu.memory_space<vmem>>, %arg7: memref<1x8xf32, #tpu.memory_space<vmem>>, %arg8: memref<8x2xf32, #tpu.memory_space<vmem>>, %arg9: memref<32x2xf32, #tpu.memory_space<vmem>>, %arg10: memref<32x8xf32, #tpu.memory_space<vmem>>) attributes {dimension_semantics = [#tpu.dimension_semantics<parallel>], iteration_bounds = array<i64: 2>, scalar_prefetch = 0 : i64, scratch_operands = 0 : i64, tpu.core_type = #tpu.core_type<tc>, window_params = [{transform_indices = @transform_0, window_bounds = array<i64: 32, 8>}, {pipeline_mode = #tpu.pipeline_mode<synchronous>, transform_indices = @transform_1, window_bounds = array<i64: 1, 8>}, {pipeline_mode = #tpu.pipeline_mode<synchronous>, transform_indices = @transform_2, window_bounds = array<i64: 8, 256>}, {pipeline_mode = #tpu.pipeline_mode<synchronous>, transform_indices = @transform_3, window_bounds = array<i64: 1, 256>}, {pipeline_mode = #tpu.pipeline_mode<synchronous>, transform_indices = @transform_4, window_bounds = array<i64: 256, 256>}, {pipeline_mode = #tpu.pipeline_mode<synchronous>, transform_indices = @transform_5, window_bounds = array<i64: 256, 8>}, {pipeline_mode = #tpu.pipeline_mode<synchronous>, transform_indices = @transform_6, window_bounds = array<i64: 1, 8>}, {pipeline_mode = #tpu.pipeline_mode<synchronous>, transform_indices = @transform_7, window_bounds = array<i64: 8, 2>}, {transform_indices = @transform_8, window_bounds = array<i64: 32, 2>}, {transform_indices = @transform_9, window_bounds = array<i64: 32, 8>}]} {
    %c0 = arith.constant 0 : index
    %c0_0 = arith.constant 0 : index
    %0 = vector.load %arg1[%c0, %c0_0] : memref<32x8xf32, #tpu.memory_space<vmem>>, vector<32x8xf32>
    %c0_1 = arith.constant 0 : index
    %c0_2 = arith.constant 0 : index
    %1 = vector.load %arg2[%c0_1, %c0_2] : memref<1x8xf32, #tpu.memory_space<vmem>>, vector<1x8xf32>
    %2 = vector.broadcast %1 : vector<1x8xf32> to vector<32x8xf32>
    %3 = arith.subf %0, %2 : vector<32x8xf32>
    %c0_3 = arith.constant 0 : index
    %c0_4 = arith.constant 0 : index
    %4 = vector.load %arg3[%c0_3, %c0_4] : memref<8x256xf32, #tpu.memory_space<vmem>>, vector<8x256xf32>
    %cst = arith.constant dense<0.000000e+00> : vector<32x256xf32>
    %5 = tpu.matmul %3, %4, %cst {dimension_numbers = #tpu.dot_dimension_numbers<[1], [0], [0], [1], [0, 0, 1, 1], [], []>} : vector<32x8xf32>, vector<8x256xf32>, vector<32x256xf32> -> vector<32x256xf32>
    %cst_5 = arith.constant 0.000000e+00 : f32
    %6 = vector.broadcast %cst_5 : f32 to vector<32x256xf32>
    %7 = arith.maximumf %5, %6 : vector<32x256xf32>
    %c0_6 = arith.constant 0 : index
    %c0_7 = arith.constant 0 : index
    %8 = vector.load %arg4[%c0_6, %c0_7] : memref<1x256xf32, #tpu.memory_space<vmem>>, vector<1x256xf32>
    %9 = vector.broadcast %8 : vector<1x256xf32> to vector<32x256xf32>
    %10 = arith.subf %7, %9 : vector<32x256xf32>
    %c0_8 = arith.constant 0 : index
    %c0_9 = arith.constant 0 : index
    %11 = vector.load %arg5[%c0_8, %c0_9] : memref<256x256xf32, #tpu.memory_space<vmem>>, vector<256x256xf32>
    %cst_10 = arith.constant dense<0.000000e+00> : vector<32x256xf32>
    %12 = tpu.matmul %10, %11, %cst_10 {dimension_numbers = #tpu.dot_dimension_numbers<[1], [0], [0], [1], [0, 0, 1, 1], [], []>} : vector<32x256xf32>, vector<256x256xf32>, vector<32x256xf32> -> vector<32x256xf32>
    %cst_11 = arith.constant 0.000000e+00 : f32
    %13 = vector.broadcast %cst_11 : f32 to vector<32x256xf32>
    %14 = arith.maximumf %12, %13 : vector<32x256xf32>
    %c0_12 = arith.constant 0 : index
    %c0_13 = arith.constant 0 : index
    %15 = vector.load %arg6[%c0_12, %c0_13] : memref<256x8xf32, #tpu.memory_space<vmem>>, vector<256x8xf32>
    %cst_14 = arith.constant dense<0.000000e+00> : vector<32x8xf32>
    %16 = tpu.matmul %14, %15, %cst_14 {dimension_numbers = #tpu.dot_dimension_numbers<[1], [0], [0], [1], [0, 0, 1, 1], [], []>} : vector<32x256xf32>, vector<256x8xf32>, vector<32x8xf32> -> vector<32x8xf32>
    %c0_15 = arith.constant 0 : index
    %c0_16 = arith.constant 0 : index
    %17 = vector.load %arg7[%c0_15, %c0_16] : memref<1x8xf32, #tpu.memory_space<vmem>>, vector<1x8xf32>
    %18 = vector.broadcast %17 : vector<1x8xf32> to vector<32x8xf32>
    %19 = arith.addf %16, %18 : vector<32x8xf32>
    %c0_17 = arith.constant 0 : index
    %c0_18 = arith.constant 0 : index
    %20 = vector.load %arg10[%c0_17, %c0_18] : memref<32x8xf32, #tpu.memory_space<vmem>>, vector<32x8xf32>
    tpu.vector_store %arg10[%c0_17, %c0_18], %19 {strides = array<i32>} : memref<32x8xf32, #tpu.memory_space<vmem>>, vector<32x8xf32>,
    %c0_19 = arith.constant 0 : index
    %c0_20 = arith.constant 0 : index
    %21 = vector.load %arg8[%c0_19, %c0_20] : memref<8x2xf32, #tpu.memory_space<vmem>>, vector<8x2xf32>
    %cst_21 = arith.constant dense<0.000000e+00> : vector<32x2xf32>
    %22 = tpu.matmul %19, %21, %cst_21 {dimension_numbers = #tpu.dot_dimension_numbers<[1], [0], [0], [1], [0, 0, 1, 1], [], []>} : vector<32x8xf32>, vector<8x2xf32>, vector<32x2xf32> -> vector<32x2xf32>
    %23 = arith.negf %22 : vector<32x2xf32>
    %24 = math.exp %23 : vector<32x2xf32>
    %cst_22 = arith.constant 1.000000e+00 : f32
    %25 = vector.broadcast %cst_22 : f32 to vector<32x2xf32>
    %26 = arith.addf %25, %24 : vector<32x2xf32>
    %27 = arith.divf %25, %26 : vector<32x2xf32>
    %c0_23 = arith.constant 0 : index
    %c0_24 = arith.constant 0 : index
    %28 = vector.load %arg9[%c0_23, %c0_24] : memref<32x2xf32, #tpu.memory_space<vmem>>, vector<32x2xf32>
    tpu.vector_store %arg9[%c0_23, %c0_24], %27 {strides = array<i32>} : memref<32x2xf32, #tpu.memory_space<vmem>>, vector<32x2xf32>,
    return
  }
  func.func @transform_0(%arg0: i32) -> (i32, i32) {
    %c0_i32 = arith.constant 0 : i32
    %c0_i32_0 = arith.constant 0 : i32
    return %arg0, %c0_i32 : i32, i32
  }
  func.func @transform_1(%arg0: i32) -> (i32, i32) {
    %c0_i32 = arith.constant 0 : i32
    %c0_i32_0 = arith.constant 0 : i32
    %c0_i32_1 = arith.constant 0 : i32
    return %c0_i32, %c0_i32_0 : i32, i32
  }
  func.func @transform_2(%arg0: i32) -> (i32, i32) {
    %c0_i32 = arith.constant 0 : i32
    %c0_i32_0 = arith.constant 0 : i32
    %c0_i32_1 = arith.constant 0 : i32
    return %c0_i32, %c0_i32_0 : i32, i32
  }
  func.func @transform_3(%arg0: i32) -> (i32, i32) {
    %c0_i32 = arith.constant 0 : i32
    %c0_i32_0 = arith.constant 0 : i32
    %c0_i32_1 = arith.constant 0 : i32
    return %c0_i32, %c0_i32_0 : i32, i32
  }
  func.func @transform_4(%arg0: i32) -> (i32, i32) {
    %c0_i32 = arith.constant 0 : i32
    %c0_i32_0 = arith.constant 0 : i32
    %c0_i32_1 = arith.constant 0 : i32
    return %c0_i32, %c0_i32_0 : i32, i32
  }
  func.func @transform_5(%arg0: i32) -> (i32, i32) {
    %c0_i32 = arith.constant 0 : i32
    %c0_i32_0 = arith.constant 0 : i32
    %c0_i32_1 = arith.constant 0 : i32
    return %c0_i32, %c0_i32_0 : i32, i32
  }
  func.func @transform_6(%arg0: i32) -> (i32, i32) {
    %c0_i32 = arith.constant 0 : i32
    %c0_i32_0 = arith.constant 0 : i32
    %c0_i32_1 = arith.constant 0 : i32
    return %c0_i32, %c0_i32_0 : i32, i32
  }
  func.func @transform_7(%arg0: i32) -> (i32, i32) {
    %c0_i32 = arith.constant 0 : i32
    %c0_i32_0 = arith.constant 0 : i32
    %c0_i32_1 = arith.constant 0 : i32
    return %c0_i32, %c0_i32_0 : i32, i32
  }
  func.func @transform_8(%arg0: i32) -> (i32, i32) {
    %c0_i32 = arith.constant 0 : i32
    %c0_i32_0 = arith.constant 0 : i32
    return %arg0, %c0_i32 : i32, i32
  }
  func.func @transform_9(%arg0: i32) -> (i32, i32) {
    %c0_i32 = arith.constant 0 : i32
    %c0_i32_0 = arith.constant 0 : i32
    return %arg0, %c0_i32 : i32, i32
  }
}

</mosaic_0001>

<llo_original>
// kernel: tpu_custom_call.1
$region0: #{tpu_custom_call.1}
  #allocation0 [shape = 'u32[]', space=smem, size = 0x4, offset = 0x4, fixed_abs, tag = 'smem constant byte address 0x4 - core index']
  #allocation1 [shape = 'u32[144,128]{1,0:T(1,128)}', space=vmem, size = 0x12000, scoped, tag = 'internal scratch']
  %s0 = inlined_call_operand.vmem [shape: f32[64,8], index: 0, kind: input, shape index: {}]
  %s1 = inlined_call_operand.vmem [shape: f32[1,8], index: 1, kind: input, shape index: {}]
  %s2 = inlined_call_operand.vmem [shape: f32[8,256], index: 2, kind: input, shape index: {}]
  %s3 = inlined_call_operand.vmem [shape: f32[1,256], index: 3, kind: input, shape index: {}]
  %s4 = inlined_call_operand.hbm [shape: f32[256,256], index: 4, kind: input, shape index: {}]
  %s5 = inlined_call_operand.vmem [shape: f32[256,8], index: 5, kind: input, shape index: {}]
  %s6 = inlined_call_operand.vmem [shape: f32[1,8], index: 6, kind: input, shape index: {}]
  %s7 = inlined_call_operand.vmem [shape: f32[8,2], index: 7, kind: input, shape index: {}]
  %s8 = inlined_call_operand.vmem [shape: f32[64,2], index: 8, kind: output, shape index: {0}]
  %s9 = inlined_call_operand.vmem [shape: f32[64,8], index: 9, kind: output, shape index: {1}]
  %10 = xla_tuple %s8, %s9
  %s11 = sld [smem:[#allocation0]]
  $region77: #{tpu_custom_call.1} parent=0
    _
  %s13 = ssub.s32 1, %s11
  %s14 = scalar_select 0, %s13, %s11
  $region1: #{tpu_custom_call.1} parent=0
    #allocation2 [shape = 'u8[262144]{0}', space=vmem, size = 0x40000, scoped, tag = 'input window, operand 4, single buffered']
    #allocation3 [shape = 's32[2]{0}', space=sflag, size = 0x8, scoped, tag = 'scoped memory for tpu_custom_call.1']
    %15 = vsyncpa [#allocation3], 0
    loop: start=0, step=1, limit=4
    $region2: #{tpu_custom_call.1} parent=1 // loop_pre_header
      _
    $region3: #{tpu_custom_call.1} parent=1 // loop_header
      %s17 = sphi 0, %s21
      %p18 = scmp.ge.s32.totalorder %s17, 4
      %s27 = sphi 0, %s29
      %s30 = sphi 0, %s27
      %s31 = sphi 0, %s30
      %s47 = sphi 0, %s31
      %s51 = sphi 0, %s51
      %s53 = sphi 0, %s51
      %s54 = sphi 0, %s53
      %s68 = sphi 0, %s54
      %s72 = sphi 0, %s72
      %s74 = sphi 0, %s72
      %s75 = sphi 0, %s74
      %s89 = sphi 0, %s75
      %s93 = sphi 0, %s93
      %s95 = sphi 0, %s93
      %s96 = sphi 0, %s95
      %s110 = sphi 0, %s96
      %s114 = sphi 0, %s114
      %s116 = sphi 0, %s114
      %s117 = sphi 0, %s116
      %s131 = sphi 0, %s117
      %s135 = sphi 0, %s135
      %s137 = sphi 0, %s135
      %s138 = sphi 0, %s137
      %s152 = sphi 0, %s138
      %s156 = sphi 0, %s156
      %s158 = sphi 0, %s156
      %s159 = sphi 0, %s158
      %s173 = sphi 0, %s159
      %s177 = sphi 0, %s177
      %s179 = sphi 0, %s177
      %s180 = sphi 0, %s179
      %s194 = sphi 0, %s180
      %s200 = sphi 0, %s202
      %s203 = sphi 0, %s200
      %s204 = sphi 0, %s203
      %s220 = sphi 0, %s204
      %s226 = sphi 0, %s228
      %s229 = sphi 0, %s226
      %s230 = sphi 0, %s229
      %s246 = sphi 0, %s230
    $region4: #{tpu_custom_call.1} parent=1 // loop_header_branch
      %20 = sbr.rel (%p18) target = $region8
    $region5: #{tpu_custom_call.1} parent=1 // loop_body
      %s22 = ssub.s32 %s17, 1
      %s23 = ssub.s32 %s17, 2
      %s24 = sadd.s32 %s17, 1
      %s25 = ssub.s32 %s17, %s24
      %p26 = scmp.eq.s32.totalorder %s25, 0
      %s28 = sadd.s32 %s27, 1
      %s29 = scalar_select %p26, %s27, %s28
      %p32 = pneg %p26
      %p33 = scmp.eq.s32.totalorder %s17, 1
      %p34 = por %p32, %p33
      %p35 = scmp.ne.s32.totalorder %s27, %s30
      %p36 = scmp.eq.s32.totalorder %s17, 0
      %p37 = por %p35, %p36
      %p38 = scmp.ne.s32.totalorder %s27, %s30
      %p39 = scmp.eq.s32.totalorder %s22, 1
      %p40 = por %p38, %p39
      %p41 = scmp.ne.s32.totalorder %s30, %s31
      %p42 = scmp.eq.s32.totalorder %s22, 0
      %p43 = por %p41, %p42
      %p44 = scmp.ne.s32.totalorder %s30, %s31
      %p45 = scmp.eq.s32.totalorder %s23, 1
      %p46 = por %p44, %p45
      %p48 = scmp.ne.s32.totalorder %s31, %s47
      %p49 = scmp.eq.s32.totalorder %s23, 0
      %p50 = por %p48, %p49
      %s52 = sadd.s32 %s51, 1
      %p55 = scmp.eq.s32.totalorder %s17, 1
      %p56 = scmp.ne.s32.totalorder %s51, %s53
      %p57 = scmp.eq.s32.totalorder %s17, 0
      %p58 = por %p56, %p57
      %p59 = scmp.ne.s32.totalorder %s51, %s53
      %p60 = scmp.eq.s32.totalorder %s22, 1
      %p61 = por %p59, %p60
      %p62 = scmp.ne.s32.totalorder %s53, %s54
      %p63 = scmp.eq.s32.totalorder %s22, 0
      %p64 = por %p62, %p63
      %p65 = scmp.ne.s32.totalorder %s53, %s54
      %p66 = scmp.eq.s32.totalorder %s23, 1
      %p67 = por %p65, %p66
      %p69 = scmp.ne.s32.totalorder %s54, %s68
      %p70 = scmp.eq.s32.totalorder %s23, 0
      %p71 = por %p69, %p70
      %s73 = sadd.s32 %s72, 1
      %p76 = scmp.eq.s32.totalorder %s17, 1
      %p77 = scmp.ne.s32.totalorder %s72, %s74
      %p78 = scmp.eq.s32.totalorder %s17, 0
      %p79 = por %p77, %p78
      %p80 = scmp.ne.s32.totalorder %s72, %s74
      %p81 = scmp.eq.s32.totalorder %s22, 1
      %p82 = por %p80, %p81
      %p83 = scmp.ne.s32.totalorder %s74, %s75
      %p84 = scmp.eq.s32.totalorder %s22, 0
      %p85 = por %p83, %p84
      %p86 = scmp.ne.s32.totalorder %s74, %s75
      %p87 = scmp.eq.s32.totalorder %s23, 1
      %p88 = por %p86, %p87
      %p90 = scmp.ne.s32.totalorder %s75, %s89
      %p91 = scmp.eq.s32.totalorder %s23, 0
      %p92 = por %p90, %p91
      %s94 = sadd.s32 %s93, 1
      %p97 = scmp.eq.s32.totalorder %s17, 1
      %p98 = scmp.ne.s32.totalorder %s93, %s95
      %p99 = scmp.eq.s32.totalorder %s17, 0
      %p100 = por %p98, %p99
      %p101 = scmp.ne.s32.totalorder %s93, %s95
      %p102 = scmp.eq.s32.totalorder %s22, 1
      %p103 = por %p101, %p102
      %p104 = scmp.ne.s32.totalorder %s95, %s96
      %p105 = scmp.eq.s32.totalorder %s22, 0
      %p106 = por %p104, %p105
      %p107 = scmp.ne.s32.totalorder %s95, %s96
      %p108 = scmp.eq.s32.totalorder %s23, 1
      %p109 = por %p107, %p108
      %p111 = scmp.ne.s32.totalorder %s96, %s110
      %p112 = scmp.eq.s32.totalorder %s23, 0
      %p113 = por %p111, %p112
      %s115 = sadd.s32 %s114, 1
      %p118 = scmp.eq.s32.totalorder %s17, 1
      %p119 = scmp.ne.s32.totalorder %s114, %s116
      %p120 = scmp.eq.s32.totalorder %s17, 0
      %p121 = por %p119, %p120
      %p122 = scmp.ne.s32.totalorder %s114, %s116
      %p123 = scmp.eq.s32.totalorder %s22, 1
      %p124 = por %p122, %p123
      %p125 = scmp.ne.s32.totalorder %s116, %s117
      %p126 = scmp.eq.s32.totalorder %s22, 0
      %p127 = por %p125, %p126
      %p128 = scmp.ne.s32.totalorder %s116, %s117
      %p129 = scmp.eq.s32.totalorder %s23, 1
      %p130 = por %p128, %p129
      %p132 = scmp.ne.s32.totalorder %s117, %s131
      %p133 = scmp.eq.s32.totalorder %s23, 0
      %p134 = por %p132, %p133
      %s136 = sadd.s32 %s135, 1
      %p139 = scmp.eq.s32.totalorder %s17, 1
      %p140 = scmp.ne.s32.totalorder %s135, %s137
      %p141 = scmp.eq.s32.totalorder %s17, 0
      %p142 = por %p140, %p141
      %p143 = scmp.ne.s32.totalorder %s135, %s137
      %p144 = scmp.eq.s32.totalorder %s22, 1
      %p145 = por %p143, %p144
      %p146 = scmp.ne.s32.totalorder %s137, %s138
      %p147 = scmp.eq.s32.totalorder %s22, 0
      %p148 = por %p146, %p147
      %p149 = scmp.ne.s32.totalorder %s137, %s138
      %p150 = scmp.eq.s32.totalorder %s23, 1
      %p151 = por %p149, %p150
      %p153 = scmp.ne.s32.totalorder %s138, %s152
      %p154 = scmp.eq.s32.totalorder %s23, 0
      %p155 = por %p153, %p154
      %s157 = sadd.s32 %s156, 1
      %p160 = scmp.eq.s32.totalorder %s17, 1
      %p161 = scmp.ne.s32.totalorder %s156, %s158
      %p162 = scmp.eq.s32.totalorder %s17, 0
      %p163 = por %p161, %p162
      %p164 = scmp.ne.s32.totalorder %s156, %s158
      %p165 = scmp.eq.s32.totalorder %s22, 1
      %p166 = por %p164, %p165
      %p167 = scmp.ne.s32.totalorder %s158, %s159
      %p168 = scmp.eq.s32.totalorder %s22, 0
      %p169 = por %p167, %p168
      %p170 = scmp.ne.s32.totalorder %s158, %s159
      %p171 = scmp.eq.s32.totalorder %s23, 1
      %p172 = por %p170, %p171
      %p174 = scmp.ne.s32.totalorder %s159, %s173
      %p175 = scmp.eq.s32.totalorder %s23, 0
      %p176 = por %p174, %p175
      %s178 = sadd.s32 %s177, 1
      %p181 = scmp.eq.s32.totalorder %s17, 1
      %p182 = scmp.ne.s32.totalorder %s177, %s179
      %p183 = scmp.eq.s32.totalorder %s17, 0
      %p184 = por %p182, %p183
      %p185 = scmp.ne.s32.totalorder %s177, %s179
      %p186 = scmp.eq.s32.totalorder %s22, 1
      %p187 = por %p185, %p186
      %p188 = scmp.ne.s32.totalorder %s179, %s180
      %p189 = scmp.eq.s32.totalorder %s22, 0
      %p190 = por %p188, %p189
      %p191 = scmp.ne.s32.totalorder %s179, %s180
      %p192 = scmp.eq.s32.totalorder %s23, 1
      %p193 = por %p191, %p192
      %p195 = scmp.ne.s32.totalorder %s180, %s194
      %p196 = scmp.eq.s32.totalorder %s23, 0
      %p197 = por %p195, %p196
      %s198 = ssub.s32 %s17, %s24
      %p199 = scmp.eq.s32.totalorder %s198, 0
      %s201 = sadd.s32 %s200, 1
      %s202 = scalar_select %p199, %s200, %s201
      %p205 = pneg %p199
      %p206 = scmp.eq.s32.totalorder %s17, 1
      %p207 = por %p205, %p206
      %p208 = scmp.ne.s32.totalorder %s200, %s203
      %p209 = scmp.eq.s32.totalorder %s17, 0
      %p210 = por %p208, %p209
      %p211 = scmp.ne.s32.totalorder %s200, %s203
      %p212 = scmp.eq.s32.totalorder %s22, 1
      %p213 = por %p211, %p212
      %p214 = scmp.ne.s32.totalorder %s203, %s204
      %p215 = scmp.eq.s32.totalorder %s22, 0
      %p216 = por %p214, %p215
      %p217 = scmp.ne.s32.totalorder %s203, %s204
      %p218 = scmp.eq.s32.totalorder %s23, 1
      %p219 = por %p217, %p218
      %p221 = scmp.ne.s32.totalorder %s204, %s220
      %p222 = scmp.eq.s32.totalorder %s23, 0
      %p223 = por %p221, %p222
      %s224 = ssub.s32 %s17, %s24
      %p225 = scmp.eq.s32.totalorder %s224, 0
      %s227 = sadd.s32 %s226, 1
      %s228 = scalar_select %p225, %s226, %s227
      %p231 = pneg %p225
      %p232 = scmp.eq.s32.totalorder %s17, 1
      %p233 = por %p231, %p232
      %p234 = scmp.ne.s32.totalorder %s226, %s229
      %p235 = scmp.eq.s32.totalorder %s17, 0
      %p236 = por %p234, %p235
      %p237 = scmp.ne.s32.totalorder %s226, %s229
      %p238 = scmp.eq.s32.totalorder %s22, 1
      %p239 = por %p237, %p238
      %p240 = scmp.ne.s32.totalorder %s229, %s230
      %p241 = scmp.eq.s32.totalorder %s22, 0
      %p242 = por %p240, %p241
      %p243 = scmp.ne.s32.totalorder %s229, %s230
      %p244 = scmp.eq.s32.totalorder %s23, 1
      %p245 = por %p243, %p244
      %p247 = scmp.ne.s32.totalorder %s230, %s246
      %p248 = scmp.eq.s32.totalorder %s23, 0
      %p249 = por %p247, %p248
      %p250 = scmp.le.s32.totalorder 1, %s17
      %p251 = scmp.lt.s32.totalorder %s17, 3
      %p252 = pnand %p250, %p251
      %p253 = pneg %p252
      // Predicated region
      $region9: #{tpu_custom_call.1} parent=5 // pred_check
        _
      $region10: #{tpu_custom_call.1} parent=5 // pred_check_branch
        %255 = sbr.rel (%p252) target = $region12
      $region11: #{tpu_custom_call.1} parent=5 // pred_region
        %s256 = ssub.s32 %s17, 1
        // Predicated region
        $region13: #{tpu_custom_call.1} parent=11 // pred_check
          %p257 = pneg %p64
        $region14: #{tpu_custom_call.1} parent=11 // pred_check_branch
          %259 = sbr.rel (%p257) target = $region16
        $region15: #{tpu_custom_call.1} parent=11 // pred_region
          _
        $region16: #{tpu_custom_call.1} parent=11 // pred_fallthru
          _
        // Predicated region
        $region17: #{tpu_custom_call.1} parent=11 // pred_check
          %p260 = pneg %p85
        $region18: #{tpu_custom_call.1} parent=11 // pred_check_branch
          %262 = sbr.rel (%p260) target = $region20
        $region19: #{tpu_custom_call.1} parent=11 // pred_region
          _
        $region20: #{tpu_custom_call.1} parent=11 // pred_fallthru
          _
        // Predicated region
        $region21: #{tpu_custom_call.1} parent=11 // pred_check
          %p263 = pneg %p106
        $region22: #{tpu_custom_call.1} parent=11 // pred_check_branch
          %265 = sbr.rel (%p263) target = $region24
        $region23: #{tpu_custom_call.1} parent=11 // pred_region
          _
        $region24: #{tpu_custom_call.1} parent=11 // pred_fallthru
          _
        // Predicated region
        $region25: #{tpu_custom_call.1} parent=11 // pred_check
          %p266 = pneg %p127
        $region26: #{tpu_custom_call.1} parent=11 // pred_check_branch
          %268 = sbr.rel (%p266) target = $region28
        $region27: #{tpu_custom_call.1} parent=11 // pred_region
          %s270 = ssub.s32 8192, 8192
          %271 = vsyncadd [#allocation3], %s270
          %s272 = sshll.u32 [#allocation2], 4
          %s273 = int_to_ptr.vmem [resolvable:$true] %s272
          %278 = dma.hbm_to_vmem [thread:$0]  %s4, 8192, %s273, [#allocation3], 256, 256, 16
        $region28: #{tpu_custom_call.1} parent=11 // pred_fallthru
          _
        // Predicated region
        $region29: #{tpu_custom_call.1} parent=11 // pred_check
          %p279 = pneg %p148
        $region30: #{tpu_custom_call.1} parent=11 // pred_check_branch
          %281 = sbr.rel (%p279) target = $region32
        $region31: #{tpu_custom_call.1} parent=11 // pred_region
          _
        $region32: #{tpu_custom_call.1} parent=11 // pred_fallthru
          _
        // Predicated region
        $region33: #{tpu_custom_call.1} parent=11 // pred_check
          %p282 = pneg %p169
        $region34: #{tpu_custom_call.1} parent=11 // pred_check_branch
          %284 = sbr.rel (%p282) target = $region36
        $region35: #{tpu_custom_call.1} parent=11 // pred_region
          _
        $region36: #{tpu_custom_call.1} parent=11 // pred_fallthru
          _
        // Predicated region
        $region37: #{tpu_custom_call.1} parent=11 // pred_check
          %p285 = pneg %p190
        $region38: #{tpu_custom_call.1} parent=11 // pred_check_branch
          %287 = sbr.rel (%p285) target = $region40
        $region39: #{tpu_custom_call.1} parent=11 // pred_region
          _
        $region40: #{tpu_custom_call.1} parent=11 // pred_fallthru
          _
      $region12: #{tpu_custom_call.1} parent=5 // pred_fallthru
        _
      %p288 = scmp.lt.s32.totalorder %s17, 2
      // Predicated region
      $region41: #{tpu_custom_call.1} parent=5 // pred_check
        %p289 = pneg %p288
      $region42: #{tpu_custom_call.1} parent=5 // pred_check_branch
        %291 = sbr.rel (%p289) target = $region44
      $region43: #{tpu_custom_call.1} parent=5 // pred_region
        // Predicated region
        $region45: #{tpu_custom_call.1} parent=43 // pred_check
          %p292 = pneg %p37
        $region46: #{tpu_custom_call.1} parent=43 // pred_check_branch
          %294 = sbr.rel (%p292) target = $region48
        $region47: #{tpu_custom_call.1} parent=43 // pred_region
          %s295 = smul.u32 4, %s17
          %p296 = scmp.lt.s32.totalorder %s295, 7
          %s297 = scalar_select %p296, %s295, 7
          %s298 = smul.addr %s297, 8
          %s299 = scalar_lea.vmem %s0, %s298
          %s300 = smul.u32 4, %s17
        $region48: #{tpu_custom_call.1} parent=43 // pred_fallthru
          _
      $region44: #{tpu_custom_call.1} parent=5 // pred_fallthru
        _
      %p301 = scmp.le.s32.totalorder 1, %s17
      %p302 = scmp.lt.s32.totalorder %s17, 3
      %p303 = pnand %p301, %p302
      %p304 = pneg %p303
      // Predicated region
      $region49: #{tpu_custom_call.1} parent=5 // pred_check
        _
      $region50: #{tpu_custom_call.1} parent=5 // pred_check_branch
        %306 = sbr.rel (%p303) target = $region52
      $region51: #{tpu_custom_call.1} parent=5 // pred_region
        %s307 = ssub.s32 %s17, 1
        // Predicated region
        $region53: #{tpu_custom_call.1} parent=51 // pred_check
          %p308 = pneg %p127
        $region54: #{tpu_custom_call.1} parent=51 // pred_check_branch
          %310 = sbr.rel (%p308) target = $region56
        $region55: #{tpu_custom_call.1} parent=51 // pred_region
          %311 = dma.done [#allocation3], 8192
        $region56: #{tpu_custom_call.1} parent=51 // pred_fallthru
          _
        %s312 = smul.u32 4, %s22
        %p313 = scmp.lt.s32.totalorder %s312, 7
        %s314 = scalar_select %p313, %s312, 7
        %s315 = smul.addr %s314, 8
        %s316 = scalar_lea.vmem %s0, %s315
        %p317 = pneg %p43
        %p318 = pneg %p40
        %p319 = pneg %p64
        %p320 = pneg %p61
        %p321 = pneg %p85
        %p322 = pneg %p82
        %p323 = pneg %p106
        %p324 = pneg %p103
        %p325 = pneg %p127
        %p326 = pneg %p124
        %p327 = pneg %p148
        %p328 = pneg %p145
        %p329 = pneg %p169
        %p330 = pneg %p166
        %p331 = pneg %p190
        %p332 = pneg %p187
        %p333 = pneg %p216
        %p334 = pneg %p213
        %s335 = smul.u32 4, %s22
        %p336 = scmp.lt.s32.totalorder %s335, 7
        %s337 = scalar_select %p336, %s335, 7
        %s338 = smul.addr %s337, 8
        %s339 = scalar_lea.vmem %s8, %s338
        %p340 = pneg %p242
        %p341 = pneg %p239
        %s342 = smul.u32 4, %s22
        %p343 = scmp.lt.s32.totalorder %s342, 7
        %s344 = scalar_select %p343, %s342, 7
        %s345 = smul.addr %s344, 8
        %s346 = scalar_lea.vmem %s9, %s345
        %s347 = smul.u32 4, %s22
        %p348 = scmp.lt.s32.totalorder %s347, 7
        %s349 = scalar_select %p348, %s347, 7
        %s350 = smul.addr %s349, 8
        %s351 = scalar_lea.vmem %s0, %s350
        %s352 = smul.u32 4, %s22
        %s353 = smul.u32 4, %s22
        %p354 = scmp.lt.s32.totalorder %s353, 7
        %s355 = scalar_select %p354, %s353, 7
        %s356 = smul.addr %s355, 8
        %s357 = scalar_lea.vmem %s8, %s356
        %s358 = smul.u32 4, %s22
        %s359 = smul.u32 4, %s22
        %p360 = scmp.lt.s32.totalorder %s359, 7
        %s361 = scalar_select %p360, %s359, 7
        %s362 = smul.addr %s361, 8
        %s363 = scalar_lea.vmem %s9, %s362
        %s364 = smul.u32 4, %s22
        %v365 = vld [vmem:[%s351] sm:$0xff]
        %v366 = vld [vmem:[%s351 + $0x8] sm:$0xff]
        %v367 = vld [vmem:[%s351 + $0x10] sm:$0xff]
        %v368 = vld [vmem:[%s351 + $0x18] sm:$0xff]
        %v369 = vld [vmem:[%s1] sm:$0x1]
        %v371 = vlaneseq
        %v372 = vshrl.u32 %v371, 7
        %v373 = vsub.s32 0, %v372
        %v374 = vrot.slane %v369, %v373
        %v376 = vsub.f32 %v365, %v374
        %v377 = vsub.f32 %v366, %v374
        %v378 = vsub.f32 %v367, %v374
        %v379 = vsub.f32 %v368, %v374
        %v380 = vld [vmem:[%s2] sm:$0xff]
        %v381 = vld [vmem:[%s2 + $0x8] sm:$0xff]
        %vm382 = vcmask 64512
        %v384 = vsel %vm382, %v376, 0
        %v387 = vsel %vm382, %v377, 0
        %v390 = vsel %vm382, %v378, 0
        %v393 = vsel %vm382, %v379, 0
        %395 = vmatprep.subr.mxu0 %v381
        %396 = vmatpush1.msra.mxu0 %v380
        %397 = vmatprep.subr.mxu0 0.0
        %398 = vmatpush1.msra.mxu0 0.0
        %399 = vmatprep.subr.mxu0 0.0
        %400 = vmatpush1.msra.mxu0 0.0
        %401 = vmatprep.subr.mxu0 0.0
        %402 = vmatpush1.msra.mxu0 0.0
        %403 = vmatprep.subr.mxu0 0.0
        %404 = vmatpush1.msra.mxu0 0.0
        %405 = vmatprep.subr.mxu0 0.0
        %406 = vmatpush1.msra.mxu0 0.0
        %407 = vmatprep.subr.mxu0 0.0
        %408 = vmatpush1.msra.mxu0 0.0
        %409 = vmatprep.subr.mxu0 0.0
        %410 = vmatpush1.msra.mxu0 0.0
        %411 = vmatprep.subr.mxu0 0.0
        %412 = vmatpush1.msra.mxu0 0.0
        %413 = vmatprep.subr.mxu0 0.0
        %414 = vmatpush1.msra.mxu0 0.0
        %415 = vmatprep.subr.mxu0 0.0
        %416 = vmatpush1.msra.mxu0 0.0
        %417 = vmatprep.subr.mxu0 0.0
        %418 = vmatpush1.msra.mxu0 0.0
        %419 = vmatprep.subr.mxu0 0.0
        %420 = vmatpush1.msra.mxu0 0.0
        %421 = vmatprep.subr.mxu0 0.0
        %422 = vmatpush1.msra.mxu0 0.0
        %423 = vmatprep.subr.mxu0 0.0
        %424 = vmatpush1.msra.mxu0 0.0
        %425 = vmatprep.subr.mxu0 0.0
        %426 = vmatpush1.msra.mxu0 0.0
        %427 = vmatprep.subr.mxu0 0.0
        %428 = vmatpush1.msra.mxu0 0.0
        %429 = vmatprep.subr.mxu0 0.0
        %430 = vmatpush1.msra.mxu0 0.0
        %431 = vmatprep.subr.mxu0 0.0
        %432 = vmatpush1.msra.mxu0 0.0
        %433 = vmatprep.subr.mxu0 0.0
        %434 = vmatpush1.msra.mxu0 0.0
        %435 = vmatprep.subr.mxu0 0.0
        %436 = vmatpush1.msra.mxu0 0.0
        %437 = vmatprep.subr.mxu0 0.0
        %438 = vmatpush1.msra.mxu0 0.0
        %439 = vmatprep.subr.mxu0 0.0
        %440 = vmatpush1.msra.mxu0 0.0
        %441 = vmatprep.subr.mxu0 0.0
        %442 = vmatpush1.msra.mxu0 0.0
        %443 = vmatprep.subr.mxu0 0.0
        %444 = vmatpush1.msra.mxu0 0.0
        %445 = vmatprep.subr.mxu0 0.0
        %446 = vmatpush1.msra.mxu0 0.0
        %447 = vmatprep.subr.mxu0 0.0
        %448 = vmatpush1.msra.mxu0 0.0
        %449 = vmatprep.subr.mxu0 0.0
        %450 = vmatpush1.msra.mxu0 0.0
        %451 = vmatprep.subr.mxu0 0.0
        %452 = vmatpush1.msra.mxu0 0.0
        %453 = vmatprep.subr.mxu0 0.0
        %454 = vmatpush1.msra.mxu0 0.0
        %455 = vmatprep.subr.mxu0 0.0
        %456 = vmatpush1.msra.mxu0 0.0
        %457 = vmatprep.subr.mxu0 0.0
        %458 = vmatpush1.msra.mxu0 0.0
        %459 = vmatprep.mubr.f32.mxu0 0.0
        %460 = vmatmul.mubr.f32.gmra.mrb[0].mxu0 %v384
        %v461 = vpop.f32.mrb[0].mxu0
        %v462 = vadd.f32 0.0, %v461
        %v463 = vpop.f32.mrb[0].mxu0
        %v464 = vadd.f32 0.0, %v463
        %465 = vmatprep.mubr.f32.mxu0 0.0
        %466 = vmatmul.mubr.f32.gmra.mrb[0].mxu0 %v387
        %v467 = vpop.f32.mrb[0].mxu0
        %v468 = vadd.f32 0.0, %v467
        %v469 = vpop.f32.mrb[0].mxu0
        %v470 = vadd.f32 0.0, %v469
        %471 = vmatprep.mubr.f32.mxu0 0.0
        %472 = vmatmul.mubr.f32.gmra.mrb[0].mxu0 %v390
        %v473 = vpop.f32.mrb[0].mxu0
        %v474 = vadd.f32 0.0, %v473
        %v475 = vpop.f32.mrb[0].mxu0
        %v476 = vadd.f32 0.0, %v475
        %477 = vmatprep.mubr.f32.mxu0 0.0
        %478 = vmatmul.mubr.f32.gmra.mrb[0].mxu0 %v393
        %v479 = vpop.f32.mrb[0].mxu0
        %v480 = vadd.f32 0.0, %v479
        %v481 = vpop.f32.mrb[0].mxu0
        %v482 = vadd.f32 0.0, %v481
        %483 = vdwg.mxu0
        %v484 = vmax.f32 %v462, 0.0
        %v485 = vmax.f32 %v464, 0.0
        %v486 = vmax.f32 %v468, 0.0
        %v487 = vmax.f32 %v470, 0.0
        %v488 = vmax.f32 %v474, 0.0
        %v489 = vmax.f32 %v476, 0.0
        %v490 = vmax.f32 %v480, 0.0
        %v491 = vmax.f32 %v482, 0.0
        %v492 = vld [vmem:[%s3] sm:$0x3]
        %v494 = vlaneseq
        %v495 = vshrl.u32 %v494, 7
        %v496 = vsub.s32 0, %v495
        %v497 = vrot.slane %v492, %v496
        %v498 = vlaneseq
        %v499 = vshrl.u32 %v498, 7
        %v500 = vsub.s32 1, %v499
        %v501 = vrot.slane %v492, %v500
        %v504 = vsub.f32 %v484, %v497
        %v505 = vsub.f32 %v485, %v501
        %v506 = vsub.f32 %v486, %v497
        %v507 = vsub.f32 %v487, %v501
        %v508 = vsub.f32 %v488, %v497
        %v509 = vsub.f32 %v489, %v501
        %v510 = vsub.f32 %v490, %v497
        %v511 = vsub.f32 %v491, %v501
        %v512 = vld [vmem:[#allocation2] sm:$0xff]
        %v513 = vld [vmem:[#allocation2 + $0x8] sm:$0xff]
        %v514 = vld [vmem:[#allocation2 + $0x10] sm:$0xff]
        %v515 = vld [vmem:[#allocation2 + $0x18] sm:$0xff]
        %v516 = vld [vmem:[#allocation2 + $0x20] sm:$0xff]
        %v517 = vld [vmem:[#allocation2 + $0x28] sm:$0xff]
        %v518 = vld [vmem:[#allocation2 + $0x30] sm:$0xff]
        %v519 = vld [vmem:[#allocation2 + $0x38] sm:$0xff]
        %v520 = vld [vmem:[#allocation2 + $0x40] sm:$0xff]
        %v521 = vld [vmem:[#allocation2 + $0x48] sm:$0xff]
        %v522 = vld [vmem:[#allocation2 + $0x50] sm:$0xff]
        %v523 = vld [vmem:[#allocation2 + $0x58] sm:$0xff]
        %v524 = vld [vmem:[#allocation2 + $0x60] sm:$0xff]
        %v525 = vld [vmem:[#allocation2 + $0x68] sm:$0xff]
        %v526 = vld [vmem:[#allocation2 + $0x70] sm:$0xff]
        %v527 = vld [vmem:[#allocation2 + $0x78] sm:$0xff]
        %v528 = vld [vmem:[#allocation2 + $0x80] sm:$0xff]
        %v529 = vld [vmem:[#allocation2 + $0x88] sm:$0xff]
        %v530 = vld [vmem:[#allocation2 + $0x90] sm:$0xff]
        %v531 = vld [vmem:[#allocation2 + $0x98] sm:$0xff]
        %v532 = vld [vmem:[#allocation2 + $0xa0] sm:$0xff]
        %v533 = vld [vmem:[#allocation2 + $0xa8] sm:$0xff]
        %v534 = vld [vmem:[#allocation2 + $0xb0] sm:$0xff]
        %v535 = vld [vmem:[#allocation2 + $0xb8] sm:$0xff]
        %v536 = vld [vmem:[#allocation2 + $0xc0] sm:$0xff]
        %v537 = vld [vmem:[#allocation2 + $0xc8] sm:$0xff]
        %v538 = vld [vmem:[#allocation2 + $0xd0] sm:$0xff]
        %v539 = vld [vmem:[#allocation2 + $0xd8] sm:$0xff]
        %v540 = vld [vmem:[#allocation2 + $0xe0] sm:$0xff]
        %v541 = vld [vmem:[#allocation2 + $0xe8] sm:$0xff]
        %v542 = vld [vmem:[#allocation2 + $0xf0] sm:$0xff]
        %v543 = vld [vmem:[#allocation2 + $0xf8] sm:$0xff]
        %v544 = vld [vmem:[#allocation2 + $0x100] sm:$0xff]
        %v545 = vld [vmem:[#allocation2 + $0x108] sm:$0xff]
        %v546 = vld [vmem:[#allocation2 + $0x110] sm:$0xff]
        %v547 = vld [vmem:[#allocation2 + $0x118] sm:$0xff]
        %v548 = vld [vmem:[#allocation2 + $0x120] sm:$0xff]
        %v549 = vld [vmem:[#allocation2 + $0x128] sm:$0xff]
        %v550 = vld [vmem:[#allocation2 + $0x130] sm:$0xff]
        %v551 = vld [vmem:[#allocation2 + $0x138] sm:$0xff]
        %v552 = vld [vmem:[#allocation2 + $0x140] sm:$0xff]
        %v553 = vld [vmem:[#allocation2 + $0x148] sm:$0xff]
        %v554 = vld [vmem:[#allocation2 + $0x150] sm:$0xff]
        %v555 = vld [vmem:[#allocation2 + $0x158] sm:$0xff]
        %v556 = vld [vmem:[#allocation2 + $0x160] sm:$0xff]
        %v557 = vld [vmem:[#allocation2 + $0x168] sm:$0xff]
        %v558 = vld [vmem:[#allocation2 + $0x170] sm:$0xff]
        %v559 = vld [vmem:[#allocation2 + $0x178] sm:$0xff]
        %v560 = vld [vmem:[#allocation2 + $0x180] sm:$0xff]
        %v561 = vld [vmem:[#allocation2 + $0x188] sm:$0xff]
        %v562 = vld [vmem:[#allocation2 + $0x190] sm:$0xff]
        %v563 = vld [vmem:[#allocation2 + $0x198] sm:$0xff]
        %v564 = vld [vmem:[#allocation2 + $0x1a0] sm:$0xff]
        %v565 = vld [vmem:[#allocation2 + $0x1a8] sm:$0xff]
        %v566 = vld [vmem:[#allocation2 + $0x1b0] sm:$0xff]
        %v567 = vld [vmem:[#allocation2 + $0x1b8] sm:$0xff]
        %v568 = vld [vmem:[#allocation2 + $0x1c0] sm:$0xff]
        %v569 = vld [vmem:[#allocation2 + $0x1c8] sm:$0xff]
        %v570 = vld [vmem:[#allocation2 + $0x1d0] sm:$0xff]
        %v571 = vld [vmem:[#allocation2 + $0x1d8] sm:$0xff]
        %v572 = vld [vmem:[#allocation2 + $0x1e0] sm:$0xff]
        %v573 = vld [vmem:[#allocation2 + $0x1e8] sm:$0xff]
        %v574 = vld [vmem:[#allocation2 + $0x1f0] sm:$0xff]
        %v575 = vld [vmem:[#allocation2 + $0x1f8] sm:$0xff]
        %576 = vmatprep.subr.mxu0 %v513
        %577 = vmatpush1.msra.mxu0 %v512
        %578 = vmatprep.subr.mxu0 %v515
        %579 = vmatpush1.msra.mxu0 %v514
        %580 = vmatprep.subr.mxu0 %v517
        %581 = vmatpush1.msra.mxu0 %v516
        %582 = vmatprep.subr.mxu0 %v519
        %583 = vmatpush1.msra.mxu0 %v518
        %584 = vmatprep.subr.mxu0 %v521
        %585 = vmatpush1.msra.mxu0 %v520
        %586 = vmatprep.subr.mxu0 %v523
        %587 = vmatpush1.msra.mxu0 %v522
        %588 = vmatprep.subr.mxu0 %v525
        %589 = vmatpush1.msra.mxu0 %v524
        %590 = vmatprep.subr.mxu0 %v527
        %591 = vmatpush1.msra.mxu0 %v526
        %592 = vmatprep.subr.mxu0 %v529
        %593 = vmatpush1.msra.mxu0 %v528
        %594 = vmatprep.subr.mxu0 %v531
        %595 = vmatpush1.msra.mxu0 %v530
        %596 = vmatprep.subr.mxu0 %v533
        %597 = vmatpush1.msra.mxu0 %v532
        %598 = vmatprep.subr.mxu0 %v535
        %599 = vmatpush1.msra.mxu0 %v534
        %600 = vmatprep.subr.mxu0 %v537
        %601 = vmatpush1.msra.mxu0 %v536
        %602 = vmatprep.subr.mxu0 %v539
        %603 = vmatpush1.msra.mxu0 %v538
        %604 = vmatprep.subr.mxu0 %v541
        %605 = vmatpush1.msra.mxu0 %v540
        %606 = vmatprep.subr.mxu0 %v543
        %607 = vmatpush1.msra.mxu0 %v542
        %608 = vmatprep.subr.mxu0 %v545
        %609 = vmatpush1.msra.mxu0 %v544
        %610 = vmatprep.subr.mxu0 %v547
        %611 = vmatpush1.msra.mxu0 %v546
        %612 = vmatprep.subr.mxu0 %v549
        %613 = vmatpush1.msra.mxu0 %v548
        %614 = vmatprep.subr.mxu0 %v551
        %615 = vmatpush1.msra.mxu0 %v550
        %616 = vmatprep.subr.mxu0 %v553
        %617 = vmatpush1.msra.mxu0 %v552
        %618 = vmatprep.subr.mxu0 %v555
        %619 = vmatpush1.msra.mxu0 %v554
        %620 = vmatprep.subr.mxu0 %v557
        %621 = vmatpush1.msra.mxu0 %v556
        %622 = vmatprep.subr.mxu0 %v559
        %623 = vmatpush1.msra.mxu0 %v558
        %624 = vmatprep.subr.mxu0 %v561
        %625 = vmatpush1.msra.mxu0 %v560
        %626 = vmatprep.subr.mxu0 %v563
        %627 = vmatpush1.msra.mxu0 %v562
        %628 = vmatprep.subr.mxu0 %v565
        %629 = vmatpush1.msra.mxu0 %v564
        %630 = vmatprep.subr.mxu0 %v567
        %631 = vmatpush1.msra.mxu0 %v566
        %632 = vmatprep.subr.mxu0 %v569
        %633 = vmatpush1.msra.mxu0 %v568
        %634 = vmatprep.subr.mxu0 %v571
        %635 = vmatpush1.msra.mxu0 %v570
        %636 = vmatprep.subr.mxu0 %v573
        %637 = vmatpush1.msra.mxu0 %v572
        %638 = vmatprep.subr.mxu0 %v575
        %639 = vmatpush1.msra.mxu0 %v574
        %640 = vmatprep.mubr.f32.mxu0 %v505
        %641 = vmatmul.mubr.f32.gmra.mrb[0].mxu0 %v504
        %v642 = vpop.f32.mrb[0].mxu0
        %v643 = vadd.f32 0.0, %v642
        %v644 = vpop.f32.mrb[0].mxu0
        %v645 = vadd.f32 0.0, %v644
        %646 = vmatprep.mubr.f32.mxu0 %v507
        %647 = vmatmul.mubr.f32.gmra.mrb[0].mxu0 %v506
        %v648 = vpop.f32.mrb[0].mxu0
        %v649 = vadd.f32 0.0, %v648
        %v650 = vpop.f32.mrb[0].mxu0
        %v651 = vadd.f32 0.0, %v650
        %652 = vmatprep.mubr.f32.mxu0 %v509
        %653 = vmatmul.mubr.f32.gmra.mrb[0].mxu0 %v508
        %v654 = vpop.f32.mrb[0].mxu0
        %v655 = vadd.f32 0.0, %v654
        %v656 = vpop.f32.mrb[0].mxu0
        %v657 = vadd.f32 0.0, %v656
        %658 = vmatprep.mubr.f32.mxu0 %v511
        %659 = vmatmul.mubr.f32.gmra.mrb[0].mxu0 %v510
        %v660 = vpop.f32.mrb[0].mxu0
        %v661 = vadd.f32 0.0, %v660
        %v662 = vpop.f32.mrb[0].mxu0
        %v663 = vadd.f32 0.0, %v662
        %664 = vdwg.mxu0
        %v665 = vmax.f32 %v643, 0.0
        %v666 = vmax.f32 %v645, 0.0
        %v667 = vmax.f32 %v649, 0.0
        %v668 = vmax.f32 %v651, 0.0
        %v669 = vmax.f32 %v655, 0.0
        %v670 = vmax.f32 %v657, 0.0
        %v671 = vmax.f32 %v661, 0.0
        %v672 = vmax.f32 %v663, 0.0
        %v673 = vld [vmem:[%s5] sm:$0xff]
        %v674 = vld [vmem:[%s5 + $0x8] sm:$0xff]
        %v675 = vld [vmem:[%s5 + $0x10] sm:$0xff]
        %v676 = vld [vmem:[%s5 + $0x18] sm:$0xff]
        %v677 = vld [vmem:[%s5 + $0x20] sm:$0xff]
        %v678 = vld [vmem:[%s5 + $0x28] sm:$0xff]
        %v679 = vld [vmem:[%s5 + $0x30] sm:$0xff]
        %v680 = vld [vmem:[%s5 + $0x38] sm:$0xff]
        %v681 = vld [vmem:[%s5 + $0x40] sm:$0xff]
        %v682 = vld [vmem:[%s5 + $0x48] sm:$0xff]
        %v683 = vld [vmem:[%s5 + $0x50] sm:$0xff]
        %v684 = vld [vmem:[%s5 + $0x58] sm:$0xff]
        %v685 = vld [vmem:[%s5 + $0x60] sm:$0xff]
        %v686 = vld [vmem:[%s5 + $0x68] sm:$0xff]
        %v687 = vld [vmem:[%s5 + $0x70] sm:$0xff]
        %v688 = vld [vmem:[%s5 + $0x78] sm:$0xff]
        %v689 = vld [vmem:[%s5 + $0x80] sm:$0xff]
        %v690 = vld [vmem:[%s5 + $0x88] sm:$0xff]
        %v691 = vld [vmem:[%s5 + $0x90] sm:$0xff]
        %v692 = vld [vmem:[%s5 + $0x98] sm:$0xff]
        %v693 = vld [vmem:[%s5 + $0xa0] sm:$0xff]
        %v694 = vld [vmem:[%s5 + $0xa8] sm:$0xff]
        %v695 = vld [vmem:[%s5 + $0xb0] sm:$0xff]
        %v696 = vld [vmem:[%s5 + $0xb8] sm:$0xff]
        %v697 = vld [vmem:[%s5 + $0xc0] sm:$0xff]
        %v698 = vld [vmem:[%s5 + $0xc8] sm:$0xff]
        %v699 = vld [vmem:[%s5 + $0xd0] sm:$0xff]
        %v700 = vld [vmem:[%s5 + $0xd8] sm:$0xff]
        %v701 = vld [vmem:[%s5 + $0xe0] sm:$0xff]
        %v702 = vld [vmem:[%s5 + $0xe8] sm:$0xff]
        %v703 = vld [vmem:[%s5 + $0xf0] sm:$0xff]
        %v704 = vld [vmem:[%s5 + $0xf8] sm:$0xff]
        %v705 = vld [vmem:[%s6] sm:$0x1]
        %v707 = vlaneseq
        %v708 = vshrl.u32 %v707, 7
        %v709 = vsub.s32 0, %v708
        %v710 = vrot.slane %v705, %v709
        %712 = vmatprep.subr.mxu0 0.0
        %713 = vmatpush1.msra.mxu0 %v673
        %714 = vmatprep.subr.mxu0 0.0
        %715 = vmatpush1.msra.mxu0 %v674
        %716 = vmatprep.subr.mxu0 0.0
        %717 = vmatpush1.msra.mxu0 %v675
        %718 = vmatprep.subr.mxu0 0.0
        %719 = vmatpush1.msra.mxu0 %v676
        %720 = vmatprep.subr.mxu0 0.0
        %721 = vmatpush1.msra.mxu0 %v677
        %722 = vmatprep.subr.mxu0 0.0
        %723 = vmatpush1.msra.mxu0 %v678
        %724 = vmatprep.subr.mxu0 0.0
        %725 = vmatpush1.msra.mxu0 %v679
        %726 = vmatprep.subr.mxu0 0.0
        %727 = vmatpush1.msra.mxu0 %v680
        %728 = vmatprep.subr.mxu0 0.0
        %729 = vmatpush1.msra.mxu0 %v681
        %730 = vmatprep.subr.mxu0 0.0
        %731 = vmatpush1.msra.mxu0 %v682
        %732 = vmatprep.subr.mxu0 0.0
        %733 = vmatpush1.msra.mxu0 %v683
        %734 = vmatprep.subr.mxu0 0.0
        %735 = vmatpush1.msra.mxu0 %v684
        %736 = vmatprep.subr.mxu0 0.0
        %737 = vmatpush1.msra.mxu0 %v685
        %738 = vmatprep.subr.mxu0 0.0
        %739 = vmatpush1.msra.mxu0 %v686
        %740 = vmatprep.subr.mxu0 0.0
        %741 = vmatpush1.msra.mxu0 %v687
        %742 = vmatprep.subr.mxu0 0.0
        %743 = vmatpush1.msra.mxu0 %v688
        %744 = vmatprep.subr.mxu0 0.0
        %745 = vmatpush1.msra.mxu0 %v689
        %746 = vmatprep.subr.mxu0 0.0
        %747 = vmatpush1.msra.mxu0 %v690
        %748 = vmatprep.subr.mxu0 0.0
        %749 = vmatpush1.msra.mxu0 %v691
        %750 = vmatprep.subr.mxu0 0.0
        %751 = vmatpush1.msra.mxu0 %v692
        %752 = vmatprep.subr.mxu0 0.0
        %753 = vmatpush1.msra.mxu0 %v693
        %754 = vmatprep.subr.mxu0 0.0
        %755 = vmatpush1.msra.mxu0 %v694
        %756 = vmatprep.subr.mxu0 0.0
        %757 = vmatpush1.msra.mxu0 %v695
        %758 = vmatprep.subr.mxu0 0.0
        %759 = vmatpush1.msra.mxu0 %v696
        %760 = vmatprep.subr.mxu0 0.0
        %761 = vmatpush1.msra.mxu0 %v697
        %762 = vmatprep.subr.mxu0 0.0
        %763 = vmatpush1.msra.mxu0 %v698
        %764 = vmatprep.subr.mxu0 0.0
        %765 = vmatpush1.msra.mxu0 %v699
        %766 = vmatprep.subr.mxu0 0.0
        %767 = vmatpush1.msra.mxu0 %v700
        %768 = vmatprep.subr.mxu0 0.0
        %769 = vmatpush1.msra.mxu0 %v701
        %770 = vmatprep.subr.mxu0 0.0
        %771 = vmatpush1.msra.mxu0 %v702
        %772 = vmatprep.subr.mxu0 0.0
        %773 = vmatpush1.msra.mxu0 %v703
        %774 = vmatprep.subr.mxu0 0.0
        %775 = vmatpush1.msra.mxu0 %v704
        %776 = vmatprep.mubr.f32.mxu0 %v666
        %777 = vmatmul.mubr.f32.gmra.mrb[0].mxu0 %v665
        %v778 = vpop.f32.mrb[0].mxu0
        %v779 = vadd.f32 %v710, %v778
        %v780 = vpop.f32.mrb[0].mxu0
        %781 = vmatprep.mubr.f32.mxu0 %v668
        %782 = vmatmul.mubr.f32.gmra.mrb[0].mxu0 %v667
        %v783 = vpop.f32.mrb[0].mxu0
        %v784 = vadd.f32 %v710, %v783
        %v785 = vpop.f32.mrb[0].mxu0
        %786 = vmatprep.mubr.f32.mxu0 %v670
        %787 = vmatmul.mubr.f32.gmra.mrb[0].mxu0 %v669
        %v788 = vpop.f32.mrb[0].mxu0
        %v789 = vadd.f32 %v710, %v788
        %v790 = vpop.f32.mrb[0].mxu0
        %791 = vmatprep.mubr.f32.mxu0 %v672
        %792 = vmatmul.mubr.f32.gmra.mrb[0].mxu0 %v671
        %v793 = vpop.f32.mrb[0].mxu0
        %v794 = vadd.f32 %v710, %v793
        %v795 = vpop.f32.mrb[0].mxu0
        %796 = vdwg.mxu0
        %797 = vst.msk [vmem:[%s363] sm:$0xff] %vm382, %v779
        %798 = vst.msk [vmem:[%s363 + $0x8] sm:$0xff] %vm382, %v784
        %799 = vst.msk [vmem:[%s363 + $0x10] sm:$0xff] %vm382, %v789
        %800 = vst.msk [vmem:[%s363 + $0x18] sm:$0xff] %vm382, %v794
        %v801 = vld [vmem:[%s7] sm:$0xff]
        %v803 = vsel %vm382, %v779, 0
        %v806 = vsel %vm382, %v784, 0
        %v809 = vsel %vm382, %v789, 0
        %v812 = vsel %vm382, %v794, 0
        %814 = vmatprep.subr.mxu0 0.0
        %815 = vmatpush1.msra.mxu0 %v801
        %816 = vmatprep.subr.mxu0 0.0
        %817 = vmatpush1.msra.mxu0 0.0
        %818 = vmatprep.subr.mxu0 0.0
        %819 = vmatpush1.msra.mxu0 0.0
        %820 = vmatprep.subr.mxu0 0.0
        %821 = vmatpush1.msra.mxu0 0.0
        %822 = vmatprep.subr.mxu0 0.0
        %823 = vmatpush1.msra.mxu0 0.0
        %824 = vmatprep.subr.mxu0 0.0
        %825 = vmatpush1.msra.mxu0 0.0
        %826 = vmatprep.subr.mxu0 0.0
        %827 = vmatpush1.msra.mxu0 0.0
        %828 = vmatprep.subr.mxu0 0.0
        %829 = vmatpush1.msra.mxu0 0.0
        %830 = vmatprep.subr.mxu0 0.0
        %831 = vmatpush1.msra.mxu0 0.0
        %832 = vmatprep.subr.mxu0 0.0
        %833 = vmatpush1.msra.mxu0 0.0
        %834 = vmatprep.subr.mxu0 0.0
        %835 = vmatpush1.msra.mxu0 0.0
        %836 = vmatprep.subr.mxu0 0.0
        %837 = vmatpush1.msra.mxu0 0.0
        %838 = vmatprep.subr.mxu0 0.0
        %839 = vmatpush1.msra.mxu0 0.0
        %840 = vmatprep.subr.mxu0 0.0
        %841 = vmatpush1.msra.mxu0 0.0
        %842 = vmatprep.subr.mxu0 0.0
        %843 = vmatpush1.msra.mxu0 0.0
        %844 = vmatprep.subr.mxu0 0.0
        %845 = vmatpush1.msra.mxu0 0.0
        %846 = vmatprep.subr.mxu0 0.0
        %847 = vmatpush1.msra.mxu0 0.0
        %848 = vmatprep.subr.mxu0 0.0
        %849 = vmatpush1.msra.mxu0 0.0
        %850 = vmatprep.subr.mxu0 0.0
        %851 = vmatpush1.msra.mxu0 0.0
        %852 = vmatprep.subr.mxu0 0.0
        %853 = vmatpush1.msra.mxu0 0.0
        %854 = vmatprep.subr.mxu0 0.0
        %855 = vmatpush1.msra.mxu0 0.0
        %856 = vmatprep.subr.mxu0 0.0
        %857 = vmatpush1.msra.mxu0 0.0
        %858 = vmatprep.subr.mxu0 0.0
        %859 = vmatpush1.msra.mxu0 0.0
        %860 = vmatprep.subr.mxu0 0.0
        %861 = vmatpush1.msra.mxu0 0.0
        %862 = vmatprep.subr.mxu0 0.0
        %863 = vmatpush1.msra.mxu0 0.0
        %864 = vmatprep.subr.mxu0 0.0
        %865 = vmatpush1.msra.mxu0 0.0
        %866 = vmatprep.subr.mxu0 0.0
        %867 = vmatpush1.msra.mxu0 0.0
        %868 = vmatprep.subr.mxu0 0.0
        %869 = vmatpush1.msra.mxu0 0.0
        %870 = vmatprep.subr.mxu0 0.0
        %871 = vmatpush1.msra.mxu0 0.0
        %872 = vmatprep.subr.mxu0 0.0
        %873 = vmatpush1.msra.mxu0 0.0
        %874 = vmatprep.subr.mxu0 0.0
        %875 = vmatpush1.msra.mxu0 0.0
        %876 = vmatprep.subr.mxu0 0.0
        %877 = vmatpush1.msra.mxu0 0.0
        %878 = vmatprep.mubr.f32.mxu0 0.0
        %879 = vmatmul.mubr.f32.gmra.mrb[0].mxu0 %v803
        %v880 = vpop.f32.mrb[0].mxu0
        %v881 = vadd.f32 0.0, %v880
        %v882 = vpop.f32.mrb[0].mxu0
        %883 = vmatprep.mubr.f32.mxu0 0.0
        %884 = vmatmul.mubr.f32.gmra.mrb[0].mxu0 %v806
        %v885 = vpop.f32.mrb[0].mxu0
        %v886 = vadd.f32 0.0, %v885
        %v887 = vpop.f32.mrb[0].mxu0
        %888 = vmatprep.mubr.f32.mxu0 0.0
        %889 = vmatmul.mubr.f32.gmra.mrb[0].mxu0 %v809
        %v890 = vpop.f32.mrb[0].mxu0
        %v891 = vadd.f32 0.0, %v890
        %v892 = vpop.f32.mrb[0].mxu0
        %893 = vmatprep.mubr.f32.mxu0 0.0
        %894 = vmatmul.mubr.f32.gmra.mrb[0].mxu0 %v812
        %v895 = vpop.f32.mrb[0].mxu0
        %v896 = vadd.f32 0.0, %v895
        %v897 = vpop.f32.mrb[0].mxu0
        %898 = vdwg.mxu0
        %v899 = vxor.u32 %v881, 2147483648
        %v900 = vxor.u32 %v886, 2147483648
        %v901 = vxor.u32 %v891, 2147483648
        %v902 = vxor.u32 %v896, 2147483648
        %v903 = vmul.f32 %v899, 1.442695
        %v904 = vpow.pop %v903
        %v905 = vmul.f32 %v900, 1.442695
        %v906 = vpow.pop %v905
        %v907 = vmul.f32 %v901, 1.442695
        %v908 = vpow.pop %v907
        %v909 = vmul.f32 %v902, 1.442695
        %v910 = vpow.pop %v909
        %v911 = vadd.f32 %v904, 1.0
        %v912 = vadd.f32 %v906, 1.0
        %v913 = vadd.f32 %v908, 1.0
        %v914 = vadd.f32 %v910, 1.0
        %v915 = vrcp.pop %v911
        %v916 = vmul.f32 1.0, %v915
        %v917 = vrcp.pop %v912
        %v918 = vmul.f32 1.0, %v917
        %v919 = vrcp.pop %v913
        %v920 = vmul.f32 1.0, %v919
        %v921 = vrcp.pop %v914
        %v922 = vmul.f32 1.0, %v921
        %vm923 = vcmask 15360
        %924 = vst.msk [vmem:[%s357] sm:$0xff] %vm923, %v916
        %925 = vst.msk [vmem:[%s357 + $0x8] sm:$0xff] %vm923, %v918
        %926 = vst.msk [vmem:[%s357 + $0x10] sm:$0xff] %vm923, %v920
        %927 = vst.msk [vmem:[%s357 + $0x18] sm:$0xff] %vm923, %v922
        %s928 = smul.u32 4, %s22
        %p929 = scmp.lt.s32.totalorder %s928, 7
        %s930 = scalar_select %p929, %s928, 7
        %s931 = smul.addr %s930, 8
        %s932 = scalar_lea.vmem %s8, %s931
        %s933 = smul.u32 4, %s22
        %p934 = scmp.lt.s32.totalorder %s933, 7
        %s935 = scalar_select %p934, %s933, 7
        %s936 = smul.addr %s935, 8
        %s937 = scalar_lea.vmem %s9, %s936
        // Predicated region
        $region57: #{tpu_custom_call.1} parent=51 // pred_check
          %p938 = pneg %p213
        $region58: #{tpu_custom_call.1} parent=51 // pred_check_branch
          %940 = sbr.rel (%p938) target = $region60
        $region59: #{tpu_custom_call.1} parent=51 // pred_region
          %s941 = smul.u32 4, %s22
        $region60: #{tpu_custom_call.1} parent=51 // pred_fallthru
          _
        // Predicated region
        $region61: #{tpu_custom_call.1} parent=51 // pred_check
          %p942 = pneg %p239
        $region62: #{tpu_custom_call.1} parent=51 // pred_check_branch
          %944 = sbr.rel (%p942) target = $region64
        $region63: #{tpu_custom_call.1} parent=51 // pred_region
          %s945 = smul.u32 4, %s22
        $region64: #{tpu_custom_call.1} parent=51 // pred_fallthru
          _
      $region52: #{tpu_custom_call.1} parent=5 // pred_fallthru
        _
      %p946 = scmp.le.s32.totalorder 2, %s17
      // Predicated region
      $region65: #{tpu_custom_call.1} parent=5 // pred_check
        %p947 = pneg %p946
      $region66: #{tpu_custom_call.1} parent=5 // pred_check_branch
        %949 = sbr.rel (%p947) target = $region68
      $region67: #{tpu_custom_call.1} parent=5 // pred_region
        %s950 = ssub.s32 %s17, 2
        // Predicated region
        $region69: #{tpu_custom_call.1} parent=67 // pred_check
          %p951 = pneg %p219
        $region70: #{tpu_custom_call.1} parent=67 // pred_check_branch
          %953 = sbr.rel (%p951) target = $region72
        $region71: #{tpu_custom_call.1} parent=67 // pred_region
          %s954 = smul.u32 4, %s23
          %p955 = scmp.lt.s32.totalorder %s954, 7
          %s956 = scalar_select %p955, %s954, 7
          %s957 = smul.addr %s956, 8
          %s958 = scalar_lea.vmem %s8, %s957
        $region72: #{tpu_custom_call.1} parent=67 // pred_fallthru
          _
        // Predicated region
        $region73: #{tpu_custom_call.1} parent=67 // pred_check
          %p959 = pneg %p245
        $region74: #{tpu_custom_call.1} parent=67 // pred_check_branch
          %961 = sbr.rel (%p959) target = $region76
        $region75: #{tpu_custom_call.1} parent=67 // pred_region
          %s962 = smul.u32 4, %s23
          %p963 = scmp.lt.s32.totalorder %s962, 7
          %s964 = scalar_select %p963, %s962, 7
          %s965 = smul.addr %s964, 8
          %s966 = scalar_lea.vmem %s9, %s965
        $region76: #{tpu_custom_call.1} parent=67 // pred_fallthru
          _
      $region68: #{tpu_custom_call.1} parent=5 // pred_fallthru
        _
    $region6: #{tpu_custom_call.1} parent=1 // loop_footer
      %s21 = sadd.s32 1, %s17
    $region7: #{tpu_custom_call.1} parent=1 // loop_footer_branch
      %16 = sbr.rel target = $region3
    $region8: #{tpu_custom_call.1} parent=1 // loop_exit
      _
    %967 = vsyncpa [#allocation3], 1
    %s968 = scalar_lea.sflag [#allocation3], 1
    %969 = vsyncpa %s968, 1

</llo_original>
